<compile_context>
chip_gen: v5e
topology: v5e:2x2
jax: 0.10.0
libtpu: 0.0.40
codegen_flags: <defaults>
</compile_context>

<pallas_src>
import functools

import jax
import jax.numpy as jnp
from jax.experimental import pallas as pl
from jax.experimental.pallas import tpu as pltpu


def _hm_loss_kernel(pred_ref, hm_ref, out_ref, acc_ref, *, rows_total,
                    rows_per_block, blocks_per_chunk, num_blocks, acc_rows,
                    inv_total, needs_mask):
    c = pl.program_id(0)          # chunk (megacore) index        -- parallel
    j = pl.program_id(1)          # row-block index within chunk  -- reduction

    @pl.when(j == 0)
    def _init():
        acc_ref[...] = jnp.zeros_like(acc_ref)

    # Steady-state path is pure VPU: subtract, square, fold-accumulate.
    d = pred_ref[...].astype(jnp.float32) - hm_ref[...].astype(jnp.float32)
    d2 = d * d

    folds = rows_per_block // acc_rows

    def _accumulate(vals):
        if folds > 1:
            # (tm, L) -> (tm//8, 8, L): splits the sublane-major axis only, so
            # the (8, 128) tiling is preserved and the axis-0 sum lowers to
            # strided VPU adds into the small (8, L) accumulator.
            vals = jnp.sum(vals.reshape(folds, acc_rows, vals.shape[-1]),
                           axis=0)
        acc_ref[...] += vals

    if needs_mask:
        b = c * blocks_per_chunk + j            # unclamped global row block
        is_tail = b >= num_blocks - 1

        # Only the true tail block and clamped overflow blocks (b >= B) need
        # the iota/compare/select; the steady-state loop skips it entirely.
        @pl.when(is_tail)
        def _masked():
            row0 = b * rows_per_block
            rid = row0 + jax.lax.broadcasted_iota(jnp.int32, d2.shape, 0)
            _accumulate(jnp.where(rid < rows_total, d2, 0.0))

        @pl.when(jnp.logical_not(is_tail))
        def _unmasked():
            _accumulate(d2)
    else:
        _accumulate(d2)

    # One-time epilogue: reduce the tiny (acc_rows, L) accumulator to this
    # chunk's (1/T-scaled) partial, splatted over a lane-dense (8, 128) block.
    @pl.when(j == pl.num_programs(1) - 1)
    def _epilogue():
        s = jnp.sum(acc_ref[...], axis=(0, 1), keepdims=True) * inv_total
        out_ref[...] = jnp.broadcast_to(s, out_ref.shape)


def _device_tuning():
    """(num_chunks, target_block_bytes, vmem_limit_bytes) per TPU generation."""
    kind = ""
    try:
        kind = jax.devices()[0].device_kind.lower()
    except Exception:  # pragma: no cover - defensive
        pass
    if "v7" in kind or "tpu7" in kind:
        # 2 TensorCores/chip, only 64 MiB VMEM per TC, ~3.2 TB/s HBM.
        return 2, 6 << 20, 44 * 1024 * 1024
    if "v6" in kind:
        # 1 TC, 128 MiB VMEM, ~1.4 TB/s HBM.
        return 1, 8 << 20, 64 * 1024 * 1024
    if "v5" in kind:
        # 1 TC, 128 MiB VMEM, ~0.8 TB/s HBM (scoped default is only 16 MiB).
        return 1, 6 << 20, 56 * 1024 * 1024
    # Unknown / emulated backend: stay conservative.
    return 1, 4 << 20, 32 * 1024 * 1024


def hm_loss(hm_preds, hm, *, target_block_bytes=None, num_chunks=None,
            vmem_limit_bytes=None):
    assert hm_preds.shape == hm.shape
    T = 1
    for s in hm_preds.shape:
        T *= int(s)
    inv_total = 1.0 / float(T)
    itemsize = jnp.dtype(hm_preds.dtype).itemsize

    auto_chunks, auto_block, auto_vmem = _device_tuning()
    num_chunks = auto_chunks if num_chunks is None else num_chunks
    target_block_bytes = (auto_block if target_block_bytes is None
                          else target_block_bytes)
    vmem_limit_bytes = auto_vmem if vmem_limit_bytes is None else vmem_limit_bytes

    # Lane-dense flatten: widest 128-multiple lane width that divides T; if
    # none does, zero-pad both operands identically (pads contribute 0 to the
    # sum of squared differences) so the slab stays fully lane-packed.
    L = next((cand for cand in (1024, 512, 256, 128) if T % cand == 0), None)
    p_flat = hm_preds.reshape(-1)
    t_flat = hm.reshape(-1)
    if L is None:
        L = 1024 if T >= 1024 else 128
        pad = (-(-T // L)) * L - T
        p_flat = jnp.pad(p_flat, (0, pad))
        t_flat = jnp.pad(t_flat, (0, pad))
    R = p_flat.shape[0] // L
    p2 = p_flat.reshape(R, L)          # contiguous -> free reshape
    t2 = t_flat.reshape(R, L)

    # Row-block size: as many rows as the per-generation block budget allows,
    # rounded to the dtype's sublane tile (16 for 2-byte dtypes, else 8), or
    # the full row extent for small inputs.
    sub = 16 if itemsize == 2 else 8
    tm = max(sub, (target_block_bytes // (L * itemsize)) // sub * sub)
    if R <= tm:
        tm = R
    B = -(-R // tm)                                 # total row blocks
    P = num_chunks if B >= num_chunks else 1        # parallel chunks (v7x TCs)
    J = -(-B // P)                                  # row blocks per chunk
    needs_mask = (P * J * tm) != R
    acc_rows = 8 if tm % 8 == 0 else tm             # tiny f32 accumulator

    # TODO(synk): for extremely large T, scale d2 by inv_total per block (or
    # use a two-level sum) to bound f32 accumulation error; heatmap-sized
    # tensors are well within f32 range as written.

    kernel = functools.partial(
        _hm_loss_kernel,
        rows_total=R,
        rows_per_block=tm,
        blocks_per_chunk=J,
        num_blocks=B,
        acc_rows=acc_rows,
        inv_total=inv_total,
        needs_mask=needs_mask,
    )

    def in_map(c, j):
        # Clamp so DMAs never index past the last row block; redundant reads
        # of overflow blocks are fully zeroed by the in-kernel tail mask.
        return (jnp.minimum(c * J + j, B - 1), 0)

    cost = pl.CostEstimate(
        flops=3 * R * L,
        transcendentals=0,
        bytes_accessed=2 * R * L * itemsize + P * 8 * 128 * 4,
    )

    out = pl.pallas_call(
        kernel,
        out_shape=jax.ShapeDtypeStruct((8 * P, 128), jnp.float32),
        grid_spec=pltpu.PrefetchScalarGridSpec(
            num_scalar_prefetch=0,
            grid=(P, J),
            in_specs=[
                pl.BlockSpec((tm, L), in_map),
                pl.BlockSpec((tm, L), in_map),
            ],
            out_specs=pl.BlockSpec((8, 128), lambda c, j: (c, 0)),
            scratch_shapes=[pltpu.VMEM((acc_rows, L), jnp.float32)],
        ),
        compiler_params=pltpu.CompilerParams(
            dimension_semantics=("parallel", "arbitrary"),
            vmem_limit_bytes=vmem_limit_bytes,
        ),
        cost_estimate=cost,
    )(p2, t2)

    # Each chunk wrote its (already 1/T-scaled) partial replicated over an
    # (8, 128) block; read one element per chunk and add.
    return jnp.sum(out.reshape(P, 8, 128)[:, 0, 0])


def _hm_loss_ref(hm_preds, hm):
    p = hm_preds.astype(jnp.float32)
    t = hm.astype(jnp.float32)
    l = (p - t) ** 2
    return jnp.mean(jnp.mean(jnp.mean(jnp.mean(l, axis=3), axis=2), axis=1))


def _check(loss, ref):
    assert jnp.allclose(loss, ref, rtol=1e-5, atol=1e-6), (loss, ref)


if __name__ == "__main__":
    key = jax.random.PRNGKey(0)

    # Main case: small heatmap shapes (batch, joints, H, W).
    k1, k2 = jax.random.split(key)
    hm_preds = jax.random.normal(k1, (2, 4, 16, 16), dtype=jnp.float32)
    hm = jax.random.normal(k2, (2, 4, 16, 16), dtype=jnp.float32)
    loss = jax.block_until_ready(hm_loss(hm_preds, hm))
    _check(loss, _hm_loss_ref(hm_preds, hm))

    # Fold-accumulator + two-chunk path (forced small blocks).
    k3, k4 = jax.random.split(k1)
    a = jax.random.normal(k3, (2, 8, 32, 128), dtype=jnp.float32)
    b = jax.random.normal(k4, (2, 8, 32, 128), dtype=jnp.float32)
    loss2 = jax.block_until_ready(
        hm_loss(a, b, target_block_bytes=64 << 10, num_chunks=2))
    _check(loss2, _hm_loss_ref(a, b))

    # Ragged rows + clamped overflow block (gated tail mask path).
    k5, k6 = jax.random.split(k2)
    c = jax.random.normal(k5, (2, 3, 17, 128), dtype=jnp.float32)
    d = jax.random.normal(k6, (2, 3, 17, 128), dtype=jnp.float32)
    loss3 = jax.block_until_ready(
        hm_loss(c, d, target_block_bytes=8 << 10, num_chunks=2))
    _check(loss3, _hm_loss_ref(c, d))

    # Total not divisible by 128 -> lane-dense zero-pad path.
    k7, k8 = jax.random.split(k3)
    e = jax.random.normal(k7, (2, 3, 15, 17), dtype=jnp.float32)
    f = jax.random.normal(k8, (2, 3, 15, 17), dtype=jnp.float32)
    loss4 = jax.block_until_ready(hm_loss(e, f))
    _check(loss4, _hm_loss_ref(e, f))

    # bf16 input contract (kernel upcasts to f32 internally).
    g = hm_preds.astype(jnp.bfloat16)
    h = hm.astype(jnp.bfloat16)
    loss5 = jax.block_until_ready(hm_loss(g, h))
    _check(loss5, _hm_loss_ref(g, h))

    print("KERNEL_OK")
</pallas_src>

<mosaic_0001>
module attributes {stable_mosaic.version = 11 : i64} {
  func.func @_hm_loss_kernel(%arg0: i32, %arg1: i32, %arg2: memref<2x1024xf32, #tpu.memory_space<vmem>>, %arg3: memref<2x1024xf32, #tpu.memory_space<vmem>>, %arg4: memref<8x128xf32, #tpu.memory_space<vmem>>, %arg5: memref<2x1024xf32, #tpu.memory_space<vmem>>) attributes {dimension_semantics = [#tpu.dimension_semantics<parallel>, #tpu.dimension_semantics<arbitrary>], iteration_bounds = array<i64: 1, 1>, scalar_prefetch = 0 : i64, scratch_operands = 1 : i64, tpu.core_type = #tpu.core_type<tc>, window_params = [{transform_indices = @transform_0, window_bounds = array<i64: 2, 1024>}, {transform_indices = @transform_1, window_bounds = array<i64: 2, 1024>}, {transform_indices = @transform_2, window_bounds = array<i64: 8, 128>}]} {
    %c0_i32 = arith.constant 0 : i32
    %0 = arith.cmpi eq, %arg1, %c0_i32 : i32
    %1 = arith.extui %0 : i1 to i32
    %c0_i32_0 = arith.constant 0 : i32
    %2 = arith.cmpi ne, %1, %c0_i32_0 : i32
    scf.if %2 {
      %cst = arith.constant 0.000000e+00 : f32
      %13 = vector.broadcast %cst : f32 to vector<2x1024xf32>
      %c0_10 = arith.constant 0 : index
      %c0_11 = arith.constant 0 : index
      %14 = vector.load %arg5[%c0_10, %c0_11] : memref<2x1024xf32, #tpu.memory_space<vmem>>, vector<2x1024xf32>
      tpu.vector_store %arg5[%c0_10, %c0_11], %13 {strides = array<i32>} : memref<2x1024xf32, #tpu.memory_space<vmem>>, vector<2x1024xf32>,
    } else {
    }
    %c0 = arith.constant 0 : index
    %c0_1 = arith.constant 0 : index
    %3 = vector.load %arg2[%c0, %c0_1] : memref<2x1024xf32, #tpu.memory_space<vmem>>, vector<2x1024xf32>
    %c0_2 = arith.constant 0 : index
    %c0_3 = arith.constant 0 : index
    %4 = vector.load %arg3[%c0_2, %c0_3] : memref<2x1024xf32, #tpu.memory_space<vmem>>, vector<2x1024xf32>
    %5 = arith.subf %3, %4 : vector<2x1024xf32>
    %6 = arith.mulf %5, %5 : vector<2x1024xf32>
    %c0_4 = arith.constant 0 : index
    %c0_5 = arith.constant 0 : index
    %7 = vector.load %arg5[%c0_4, %c0_5] : memref<2x1024xf32, #tpu.memory_space<vmem>>, vector<2x1024xf32>
    %8 = arith.addf %7, %6 : vector<2x1024xf32>
    %c0_6 = arith.constant 0 : index
    %c0_7 = arith.constant 0 : index
    %9 = vector.load %arg5[%c0_6, %c0_7] : memref<2x1024xf32, #tpu.memory_space<vmem>>, vector<2x1024xf32>
    tpu.vector_store %arg5[%c0_6, %c0_7], %8 {strides = array<i32>} : memref<2x1024xf32, #tpu.memory_space<vmem>>, vector<2x1024xf32>,
    %c0_i32_8 = arith.constant 0 : i32
    %10 = arith.cmpi eq, %arg1, %c0_i32_8 : i32
    %11 = arith.extui %10 : i1 to i32
    %c0_i32_9 = arith.constant 0 : i32
    %12 = arith.cmpi ne, %11, %c0_i32_9 : i32
    scf.if %12 {
      %c0_10 = arith.constant 0 : index
      %c0_11 = arith.constant 0 : index
      %13 = vector.load %arg5[%c0_10, %c0_11] : memref<2x1024xf32, #tpu.memory_space<vmem>>, vector<2x1024xf32>
      %14 = vector.shape_cast %13 : vector<2x1024xf32> to vector<1x2x1024xf32>
      %cst = arith.constant dense<0.000000e+00> : vector<1xf32>
      %15 = vector.multi_reduction <add>, %14, %cst [1, 2] : vector<1x2x1024xf32> to vector<1xf32>
      %16 = vector.shape_cast %15 : vector<1xf32> to vector<1x1x1xf32>
      %17 = vector.extract %16[0, 0, 0] : f32 from vector<1x1x1xf32>
      %18 = vector.broadcast %17 : f32 to vector<1x1xf32>
      %cst_12 = arith.constant 4.8828125E-4 : f32
      %19 = vector.broadcast %cst_12 : f32 to vector<1x1xf32>
      %20 = arith.mulf %18, %19 : vector<1x1xf32>
      %21 = vector.shape_cast %20 : vector<1x1xf32> to vector<1x1xf32>
      %22 = vector.broadcast %21 : vector<1x1xf32> to vector<8x128xf32>
      %c0_13 = arith.constant 0 : index
      %c0_14 = arith.constant 0 : index
      %23 = vector.load %arg4[%c0_13, %c0_14] : memref<8x128xf32, #tpu.memory_space<vmem>>, vector<8x128xf32>
      tpu.vector_store %arg4[%c0_13, %c0_14], %22 {strides = array<i32>} : memref<8x128xf32, #tpu.memory_space<vmem>>, vector<8x128xf32>,
    } else {
    }
    return
  }
  func.func @transform_0(%arg0: i32, %arg1: i32) -> (i32, i32) {
    %c1_i32 = arith.constant 1 : i32
    %0 = arith.muli %arg0, %c1_i32 : i32
    %1 = arith.addi %0, %arg1 : i32
    %c0_i32 = arith.constant 0 : i32
    %2 = arith.minsi %1, %c0_i32 : i32
    %c0_i32_0 = arith.constant 0 : i32
    %c0_i32_1 = arith.constant 0 : i32
    return %2, %c0_i32_0 : i32, i32
  }
  func.func @transform_1(%arg0: i32, %arg1: i32) -> (i32, i32) {
    %c1_i32 = arith.constant 1 : i32
    %0 = arith.muli %arg0, %c1_i32 : i32
    %1 = arith.addi %0, %arg1 : i32
    %c0_i32 = arith.constant 0 : i32
    %2 = arith.minsi %1, %c0_i32 : i32
    %c0_i32_0 = arith.constant 0 : i32
    %c0_i32_1 = arith.constant 0 : i32
    return %2, %c0_i32_0 : i32, i32
  }
  func.func @transform_2(%arg0: i32, %arg1: i32) -> (i32, i32) {
    %c0_i32 = arith.constant 0 : i32
    %c0_i32_0 = arith.constant 0 : i32
    return %arg0, %c0_i32 : i32, i32
  }
}

</mosaic_0001>

<llo_original>
// kernel: tpu_custom_call.1
$region0: #{tpu_custom_call.1}
  #allocation0 [shape = 'u32[]', space=smem, size = 0x4, offset = 0x4, fixed_abs, tag = 'smem constant byte address 0x4 - core index']
  #allocation1 [shape = 'u32[72,128]{1,0:T(1,128)}', space=vmem, size = 0x9000, scoped, tag = 'internal scratch']
  #allocation2 [shape = 'f32[2,1024]{1,0:T(2,128)}', space=vmem, size = 0x2000, scoped, tag = 'scratch operand']
  %s0 = inlined_call_operand.hbm [shape: f32[2,1024], index: 0, kind: input, shape index: {}]
  %s1 = inlined_call_operand.hbm [shape: f32[2,1024], index: 1, kind: input, shape index: {}]
  %s2 = inlined_call_operand.hbm [shape: f32[8,128], index: 2, kind: output, shape index: {}]
  %s3 = sld [smem:[#allocation0]]
  $region34: #{tpu_custom_call.1} parent=0
    _
  %s5 = ssub.s32 1, %s3
  %s6 = scalar_select 0, %s5, %s3
  $region1: #{tpu_custom_call.1} parent=0
    #allocation3 [shape = 'u8[8192]{0}', space=vmem, size = 0x2000, scoped, tag = 'input window, operand 0, single buffered']
    #allocation4 [shape = 's32[1]{0}', space=sflag, size = 0x4, scoped, tag = 'scoped memory for tpu_custom_call.1']
    #allocation5 [shape = 's32[1]{0}', space=sflag, size = 0x4, scoped, tag = 'scoped memory for tpu_custom_call.1']
    #allocation6 [shape = 'u8[8192]{0}', space=vmem, size = 0x2000, scoped, tag = 'input window, operand 1, single buffered']
    #allocation7 [shape = 's32[1]{0}', space=sflag, size = 0x4, scoped, tag = 'scoped memory for tpu_custom_call.1']
    #allocation8 [shape = 'u8[4096]{0}', space=vmem, size = 0x1000, scoped, tag = 'output window, operand 0, single buffered']
    %7 = vsyncpa [#allocation4], 0
    %8 = vsyncpa [#allocation7], 0
    %9 = vsyncpa [#allocation5], 0
    // Predicated region
    $region2: #{tpu_custom_call.1} parent=1 // pred_check
      _
    $region3: #{tpu_custom_call.1} parent=1 // pred_check_branch
      %11 = sbr.rel (0) target = $region5
    $region4: #{tpu_custom_call.1} parent=1 // pred_region
      %s12 = sadd.s32 0, 0
      %p13 = scmp.lt.s32.totalorder %s12, 0
      %s14 = scalar_select %p13, %s12, 0
      %16 = vsyncadd [#allocation4], 0
      %s17 = smul.addr %s14, 8
      %s18 = smul.addr %s17, 2
      %s19 = scalar_lea.hbm %s0, %s18
      %s21 = sshll.u32 %s19, 4
      %s22 = int_to_ptr.hbm [resolvable:$true] %s21
      %s23 = sshll.u32 [#allocation3], 4
      %s24 = int_to_ptr.vmem [resolvable:$true] %s23
      %26 = dma.hbm_to_vmem [thread:$0]  %s22, 256, %s24, [#allocation4]
    $region5: #{tpu_custom_call.1} parent=1 // pred_fallthru
      _
    // Predicated region
    $region6: #{tpu_custom_call.1} parent=1 // pred_check
      _
    $region7: #{tpu_custom_call.1} parent=1 // pred_check_branch
      %28 = sbr.rel (0) target = $region9
    $region8: #{tpu_custom_call.1} parent=1 // pred_region
      %s29 = sadd.s32 0, 0
      %p30 = scmp.lt.s32.totalorder %s29, 0
      %s31 = scalar_select %p30, %s29, 0
      %33 = vsyncadd [#allocation7], 0
      %s34 = smul.addr %s31, 8
      %s35 = smul.addr %s34, 2
      %s36 = scalar_lea.hbm %s1, %s35
      %s38 = sshll.u32 %s36, 4
      %s39 = int_to_ptr.hbm [resolvable:$true] %s38
      %s40 = sshll.u32 [#allocation6], 4
      %s41 = int_to_ptr.vmem [resolvable:$true] %s40
      %43 = dma.hbm_to_vmem [thread:$0]  %s39, 256, %s41, [#allocation7]
    $region9: #{tpu_custom_call.1} parent=1 // pred_fallthru
      _
    // Predicated region
    $region10: #{tpu_custom_call.1} parent=1 // pred_check
      _
    $region11: #{tpu_custom_call.1} parent=1 // pred_check_branch
      %45 = sbr.rel (0) target = $region13
    $region12: #{tpu_custom_call.1} parent=1 // pred_region
      %47 = dma.done [#allocation4], 256
    $region13: #{tpu_custom_call.1} parent=1 // pred_fallthru
      _
    // Predicated region
    $region14: #{tpu_custom_call.1} parent=1 // pred_check
      _
    $region15: #{tpu_custom_call.1} parent=1 // pred_check_branch
      %49 = sbr.rel (0) target = $region17
    $region16: #{tpu_custom_call.1} parent=1 // pred_region
      %51 = dma.done [#allocation7], 256
    $region17: #{tpu_custom_call.1} parent=1 // pred_fallthru
      _
    %s52 = sadd.s32 0, 0
    %p53 = scmp.lt.s32.totalorder %s52, 0
    %s54 = scalar_select %p53, %s52, 0
    %s55 = sadd.s32 0, 0
    %p56 = scmp.lt.s32.totalorder %s55, 0
    %s57 = scalar_select %p56, %s55, 0
    %p58 = scmp.eq.s32.totalorder 0, 0
    // Predicated region
    $region18: #{tpu_custom_call.1} parent=1 // pred_check
      %p59 = pneg %p58
    $region19: #{tpu_custom_call.1} parent=1 // pred_check_branch
      %61 = sbr.rel (%p59) target = $region21
    $region20: #{tpu_custom_call.1} parent=1 // pred_region
      %62 = vst [vmem:[#allocation2] sm:$0xff] 0.0
      %63 = vst [vmem:[#allocation2 + $0x8] sm:$0xff] 0.0
    $region21: #{tpu_custom_call.1} parent=1 // pred_fallthru
      _
    %v64 = vld [vmem:[#allocation3] sm:$0xff]
    %v65 = vld [vmem:[#allocation3 + $0x8] sm:$0xff]
    %v66 = vld [vmem:[#allocation6] sm:$0xff]
    %v67 = vld [vmem:[#allocation6 + $0x8] sm:$0xff]
    %v68 = vsub.f32 %v64, %v66
    %v69 = vsub.f32 %v65, %v67
    %v70 = vmul.f32 %v68, %v68
    %v71 = vmul.f32 %v69, %v69
    %v72 = vld [vmem:[#allocation2] sm:$0xff]
    %v73 = vld [vmem:[#allocation2 + $0x8] sm:$0xff]
    %v74 = vadd.f32 %v72, %v70
    %v75 = vadd.f32 %v73, %v71
    %76 = vst [vmem:[#allocation2] sm:$0xff] %v74
    %77 = vst [vmem:[#allocation2 + $0x8] sm:$0xff] %v75
    // Predicated region
    $region22: #{tpu_custom_call.1} parent=1 // pred_check
      %p78 = pneg %p58
    $region23: #{tpu_custom_call.1} parent=1 // pred_check_branch
      %80 = sbr.rel (%p78) target = $region25
    $region24: #{tpu_custom_call.1} parent=1 // pred_region
      %v81 = vld [vmem:[#allocation2] sm:$0xff]
      %v82 = vld [vmem:[#allocation2 + $0x8] sm:$0xff]
      %85 = vst [vmem:[#allocation1] ss:$4 sm:$0xff] %v81
      %s86 = scalar_lea.vmem [#allocation1], 32
      %87 = vst [vmem:[%s86] ss:$4 sm:$0xff] %v82
      %v88 = vld.sshfl [vmem:[#allocation1] sm:$0xff pattern:$0x73625140]
      %v89 = vld.sshfl [vmem:[#allocation1 + $0x8] sm:$0xff pattern:$0x73625140]
      %v90 = vld.sshfl [vmem:[#allocation1 + $0x10] sm:$0xff pattern:$0x73625140]
      %v91 = vld.sshfl [vmem:[#allocation1 + $0x18] sm:$0xff pattern:$0x73625140]
      %v92 = vld.sshfl [vmem:[#allocation1 + $0x20] sm:$0xff pattern:$0x73625140]
      %v93 = vld.sshfl [vmem:[#allocation1 + $0x28] sm:$0xff pattern:$0x73625140]
      %v94 = vld.sshfl [vmem:[#allocation1 + $0x30] sm:$0xff pattern:$0x73625140]
      %v95 = vld.sshfl [vmem:[#allocation1 + $0x38] sm:$0xff pattern:$0x73625140]
      %vm104 = vcmask 1041408
      %v105 = vsel %vm104, %v88, 0.0
      %v106 = vsel %vm104, %v89, 0.0
      %v107 = vadd.f32 %v105, %v106
      %v108 = vsel %vm104, %v90, 0.0
      %v109 = vadd.f32 %v107, %v108
      %v110 = vsel %vm104, %v91, 0.0
      %v111 = vadd.f32 %v109, %v110
      %v112 = vsel %vm104, %v92, 0.0
      %v113 = vadd.f32 %v111, %v112
      %v114 = vsel %vm104, %v93, 0.0
      %v115 = vadd.f32 %v113, %v114
      %v116 = vsel %vm104, %v94, 0.0
      %v117 = vadd.f32 %v115, %v116
      %v118 = vsel %vm104, %v95, 0.0
      %v119 = vadd.f32 %v117, %v118
      %120 = vadd.xlane.f32.xlu0 %v119
      %v121 = vpop.xlane.xlu0 %120
      %v122 = vrot.slane %v121, 4
      %v123 = vadd.f32 %v121, %v122
      %v124 = vrot.slane %v123, 2
      %v125 = vadd.f32 %v123, %v124
      %v126 = vrot.slane %v125, 1
      %v127 = vadd.f32 %v125, %v126
      %s128 = vtos %v127
      %v129 = vstv %s128
      %v130 = vmul.f32 %v129, 0.00048828125
      %131 = vst [vmem:[#allocation8] sm:$0xff] %v130
    $region25: #{tpu_custom_call.1} parent=1 // pred_fallthru
      _
    // Predicated region
    $region26: #{tpu_custom_call.1} parent=1 // pred_check
      _
    $region27: #{tpu_custom_call.1} parent=1 // pred_check_branch
      %133 = sbr.rel (0) target = $region29
    $region28: #{tpu_custom_call.1} parent=1 // pred_region
      %135 = vsyncadd [#allocation5], 0
      %s137 = sshll.u32 [#allocation8], 4
      %s138 = int_to_ptr.vmem [resolvable:$true] %s137
      %s139 = sshll.u32 %s2, 4
      %s140 = int_to_ptr.hbm [resolvable:$true] %s139
      %142 = dma.vmem_to_hbm [thread:$0]  %s138, 128, %s140, [#allocation5]
    $region29: #{tpu_custom_call.1} parent=1 // pred_fallthru
      _
    // Predicated region
    $region30: #{tpu_custom_call.1} parent=1 // pred_check
      _
    $region31: #{tpu_custom_call.1} parent=1 // pred_check_branch
      %144 = sbr.rel (0) target = $region33
    $region32: #{tpu_custom_call.1} parent=1 // pred_region
      %146 = dma.done [#allocation5], 128
    $region33: #{tpu_custom_call.1} parent=1 // pred_fallthru
      _
    %147 = vsyncpa [#allocation4], 1
    %148 = vsyncpa [#allocation7], 1
    %149 = vsyncpa [#allocation5], 1

</llo_original>
